<compile_context>
chip_gen: v6e
topology: v6e:2x2x1
jax: 0.10.0
libtpu: 0.0.40
codegen_flags: <defaults>
</compile_context>

<pallas_src>
import functools

import jax
import jax.numpy as jnp
from jax.experimental import pallas as pl
from jax.experimental.pallas import tpu as pltpu

CLASSES = 10
K = 5
EPS = 1e-10


def blackout4_kernel(yhat_ref, side_ref, loss_ref, *, k, eps, inv_denom,
                     approx_recip):
    # yhat_ref : [bb, V]        logits (raw, unpadded; upcast in-kernel)
    # side_ref : [2, bb, K+1]   i32; plane 0 = indices (y | ind),
    #                                plane 1 = bitcast(f32 weights (q | p))
    # loss_ref : [G, 1]         f32 in SMEM; this block writes row program_id(0)
    x = yhat_ref[...].astype(jnp.float32)                 # [bb, V]
    idx = side_ref[0]                                     # [bb, K+1] i32
    w = pltpu.bitcast(side_ref[1], jnp.float32)           # [bb, K+1] f32

    bb, V = x.shape
    kp1 = k + 1

    # Row max over the logical vocab width (reduction is masked at the logical
    # shape, so no sentinel padding is required).
    m = jnp.max(x, axis=-1, keepdims=True)                # [bb, 1]

    # K+1 independent one-hot gathers from the raw logits (true class in
    # column 0, sampled negatives in columns 1..K), deposited via one concat
    # so the lane-reduces are not serially chained through a VPU accumulator.
    # TODO(synk): for large V / K, restructure as an SMEM-prefetched DMA
    # gather (or vocab-tile skipping) instead of K+1 full-width passes.
    colv = jax.lax.broadcasted_iota(jnp.int32, (bb, V), 1)
    cols = []
    for j in range(kp1):                                  # tiny static unroll
        idx_j = idx[:, j:j + 1]                           # [bb, 1]
        cols.append(jnp.sum(jnp.where(colv == idx_j, x, 0.0),
                            axis=-1, keepdims=True))      # [bb, 1]
    g = jnp.concatenate(cols, axis=-1) - m                # [bb, K+1]  max-shift
                                                          # on the narrow slab

    # one batched exp: col 0 -> q*exp(Yg), cols 1..K -> p*exp(complement)
    vals = w * jnp.exp(g)                                 # [bb, K+1]
    total = jnp.sum(vals, axis=-1, keepdims=True)         # [bb, 1]
    if approx_recip:
        out = vals * pl.reciprocal(total, approx=True)    # EUP path (flagged)
    else:
        out = vals / total                                # exact divide
                                                          # (bit-faithful)

    # one batched log: column 0 contributes log(out), the rest log(1 - out)
    colk = jax.lax.broadcasted_iota(jnp.int32, (bb, kp1), 1)
    arg = jnp.where(colk == 0, out, 1.0 - out) + eps
    partial = jnp.sum(jnp.log(arg))                       # scalar sum for block

    # Scalar write to the SMEM output (no masked VMEM store / tile writeback).
    loss_ref[pl.program_id(0), 0] = -partial * inv_denom


def blackout4_loss(yhat, y, ind, p, *, k=K, eps=EPS, block_b=None,
                   approx_recip=False):
    B, V = yhat.shape
    kp1 = k + 1

    # Keep logits in their HBM dtype (f32 or bf16); upcast happens in-kernel.
    if not jnp.issubdtype(yhat.dtype, jnp.floating):
        yhat = yhat.astype(jnp.float32)

    # Optional batch grid: bb rows per block, partial sums finished in JAX.
    bb = B if block_b is None else min(block_b, B)
    assert B % bb == 0, "block_b must divide the batch size"
    if bb != B:
        assert bb % 8 == 0, "batch block must be a multiple of 8 sublanes"
    G = B // bb

    # Consolidate the tiny side inputs into ONE int32 array:
    #   plane 0: [y | ind]  (int32 indices)
    #   plane 1: [q | p]    (float32 weights, bitcast to int32 for the DMA)
    idx = jnp.concatenate(
        [y.reshape(B, 1).astype(jnp.int32), ind.astype(jnp.int32)], axis=1)
    p = p.astype(jnp.float32)
    w = jnp.concatenate([jnp.min(p, axis=-1, keepdims=True), p], axis=1)
    side = jnp.stack([idx, jax.lax.bitcast_convert_type(w, jnp.int32)], axis=0)

    kernel = functools.partial(
        blackout4_kernel, k=k, eps=eps, inv_denom=1.0 / (B * kp1),
        approx_recip=approx_recip)

    partials = pl.pallas_call(
        kernel,
        grid=(G,),
        out_shape=jax.ShapeDtypeStruct((G, 1), jnp.float32),
        in_specs=[
            pl.BlockSpec((bb, V), lambda i: (i, 0)),
            pl.BlockSpec((2, bb, kp1), lambda i: (0, i, 0)),
        ],
        # Full (G, 1) result lives in SMEM for the whole grid; each block
        # writes its own row with a scalar store.
        out_specs=pl.BlockSpec(memory_space=pltpu.MemorySpace.SMEM),
        # The SMEM output is shared across grid steps, so the batch axis stays
        # "arbitrary".  TODO(synk): for v7x megacore, switch to per-block
        # blocked outputs and mark this axis "parallel".
        compiler_params=pltpu.CompilerParams(
            dimension_semantics=("arbitrary",)),
    )(yhat, side)

    return jnp.sum(partials)


def blackout4_ref(yhat, y, ind, p, *, k=K, eps=EPS):
    """Pure-JAX reference mirroring the PyTorch forward."""
    B = yhat.shape[0]
    m = jnp.max(yhat, axis=-1, keepdims=True)
    x = yhat - m
    Yg = jnp.take_along_axis(x, y[:, None], axis=1)            # [B,1]
    comp = jnp.take_along_axis(x, ind, axis=1)                 # [B,k]
    comp = p * jnp.exp(comp)
    q = jnp.min(p, axis=-1, keepdims=True)
    Yg = q * jnp.exp(Yg)
    out = jnp.concatenate([Yg, comp], axis=1)
    out = out / jnp.sum(out, axis=1, keepdims=True)
    out_c = 1.0 - out
    mask = jnp.zeros((B, k + 1)).at[:, 0].set(1.0)
    mask_c = 1.0 - mask
    return -1.0 * jnp.mean(jnp.log(out + eps) * mask + jnp.log(out_c + eps) * mask_c)


if __name__ == "__main__":
    B = 8          # batch
    V = 100        # vocabulary size (np.random.choice(a=100) in the original)

    key = jax.random.PRNGKey(0)
    k_x, k_y, k_ind = jax.random.split(key, 3)

    # deterministic proposal distributions prob[class] over V outcomes
    prob = jax.nn.softmax(
        jnp.sin(jnp.arange(CLASSES * V, dtype=jnp.float32)).reshape(CLASSES, V),
        axis=-1,
    )

    yhat = jax.random.normal(k_x, (B, V), dtype=jnp.float32)
    y = jax.random.randint(k_y, (B,), 0, CLASSES, dtype=jnp.int32)

    # host-side sampling (replaces np.random.choice in the torch module)
    prob_y = prob[y]                                           # [B, V]
    ind = jax.random.categorical(
        k_ind, jnp.log(prob_y), axis=-1, shape=(K, B)
    ).T.astype(jnp.int32)                                      # [B, K]
    p = 1.0 / jnp.take_along_axis(prob_y, ind, axis=1)         # [B, K]

    loss = blackout4_loss(yhat, y, ind, p)
    loss = jax.block_until_ready(loss)

    ref = blackout4_ref(yhat, y, ind, p)
    assert jnp.allclose(loss, ref, rtol=1e-3, atol=1e-5), (loss, ref)

    print("KERNEL_OK")
</pallas_src>

<mosaic_0001>
module attributes {stable_mosaic.version = 11 : i64} {
  func.func @blackout4_kernel(%arg0: i32, %arg1: memref<8x100xf32, #tpu.memory_space<vmem>>, %arg2: memref<2x8x6xi32, #tpu.memory_space<vmem>>, %arg3: memref<1x1xf32, #tpu.memory_space<smem>>) attributes {dimension_semantics = [#tpu.dimension_semantics<arbitrary>], iteration_bounds = array<i64: 1>, scalar_prefetch = 0 : i64, scratch_operands = 0 : i64, tpu.core_type = #tpu.core_type<tc>, window_params = [{transform_indices = @transform_0, window_bounds = array<i64: 8, 100>}, {transform_indices = @transform_1, window_bounds = array<i64: 2, 8, 6>}, {transform_indices = @transform_2, window_bounds = array<i64: 1, 1>}]} {
    %c0 = arith.constant 0 : index
    %c0_0 = arith.constant 0 : index
    %0 = vector.load %arg1[%c0, %c0_0] : memref<8x100xf32, #tpu.memory_space<vmem>>, vector<8x100xf32>
    %c0_1 = arith.constant 0 : index
    %c0_2 = arith.constant 0 : index
    %c0_3 = arith.constant 0 : index
    %1 = vector.load %arg2[%c0_1, %c0_2, %c0_3] : memref<2x8x6xi32, #tpu.memory_space<vmem>>, vector<1x8x6xi32>
    %2 = vector.shape_cast %1 : vector<1x8x6xi32> to vector<8x6xi32>
    %c1 = arith.constant 1 : index
    %c0_4 = arith.constant 0 : index
    %c0_5 = arith.constant 0 : index
    %3 = vector.load %arg2[%c1, %c0_4, %c0_5] : memref<2x8x6xi32, #tpu.memory_space<vmem>>, vector<1x8x6xi32>
    %4 = vector.shape_cast %3 : vector<1x8x6xi32> to vector<8x6xi32>
    %5 = tpu.bitcast %4 : vector<8x6xi32> -> vector<8x6xf32>
    %cst = arith.constant dense<0xFF800000> : vector<8xf32>
    %6 = vector.multi_reduction <maximumf>, %0, %cst [1] : vector<8x100xf32> to vector<8xf32>
    %7 = vector.shape_cast %6 : vector<8xf32> to vector<8x1xf32>
    %8 = tpu.iota {dimensions = array<i32: 1>} : vector<8x100xi32>
    %9 = vector.extract_strided_slice %2 {offsets = [0, 0], sizes = [8, 1], strides = [1, 1]} : vector<8x6xi32> to vector<8x1xi32>
    %10 = vector.broadcast %9 : vector<8x1xi32> to vector<8x100xi32>
    %11 = arith.cmpi eq, %8, %10 : vector<8x100xi32>
    %cst_6 = arith.constant 0.000000e+00 : f32
    %12 = vector.broadcast %cst_6 : f32 to vector<8x100xf32>
    %13 = arith.select %11, %0, %12 : vector<8x100xi1>, vector<8x100xf32>
    %cst_7 = arith.constant dense<0.000000e+00> : vector<8xf32>
    %14 = vector.multi_reduction <add>, %13, %cst_7 [1] : vector<8x100xf32> to vector<8xf32>
    %15 = vector.shape_cast %14 : vector<8xf32> to vector<8x1xf32>
    %16 = vector.extract_strided_slice %2 {offsets = [0, 1], sizes = [8, 1], strides = [1, 1]} : vector<8x6xi32> to vector<8x1xi32>
    %17 = vector.broadcast %16 : vector<8x1xi32> to vector<8x100xi32>
    %18 = arith.cmpi eq, %8, %17 : vector<8x100xi32>
    %cst_8 = arith.constant 0.000000e+00 : f32
    %19 = vector.broadcast %cst_8 : f32 to vector<8x100xf32>
    %20 = arith.select %18, %0, %19 : vector<8x100xi1>, vector<8x100xf32>
    %cst_9 = arith.constant dense<0.000000e+00> : vector<8xf32>
    %21 = vector.multi_reduction <add>, %20, %cst_9 [1] : vector<8x100xf32> to vector<8xf32>
    %22 = vector.shape_cast %21 : vector<8xf32> to vector<8x1xf32>
    %23 = vector.extract_strided_slice %2 {offsets = [0, 2], sizes = [8, 1], strides = [1, 1]} : vector<8x6xi32> to vector<8x1xi32>
    %24 = vector.broadcast %23 : vector<8x1xi32> to vector<8x100xi32>
    %25 = arith.cmpi eq, %8, %24 : vector<8x100xi32>
    %cst_10 = arith.constant 0.000000e+00 : f32
    %26 = vector.broadcast %cst_10 : f32 to vector<8x100xf32>
    %27 = arith.select %25, %0, %26 : vector<8x100xi1>, vector<8x100xf32>
    %cst_11 = arith.constant dense<0.000000e+00> : vector<8xf32>
    %28 = vector.multi_reduction <add>, %27, %cst_11 [1] : vector<8x100xf32> to vector<8xf32>
    %29 = vector.shape_cast %28 : vector<8xf32> to vector<8x1xf32>
    %30 = vector.extract_strided_slice %2 {offsets = [0, 3], sizes = [8, 1], strides = [1, 1]} : vector<8x6xi32> to vector<8x1xi32>
    %31 = vector.broadcast %30 : vector<8x1xi32> to vector<8x100xi32>
    %32 = arith.cmpi eq, %8, %31 : vector<8x100xi32>
    %cst_12 = arith.constant 0.000000e+00 : f32
    %33 = vector.broadcast %cst_12 : f32 to vector<8x100xf32>
    %34 = arith.select %32, %0, %33 : vector<8x100xi1>, vector<8x100xf32>
    %cst_13 = arith.constant dense<0.000000e+00> : vector<8xf32>
    %35 = vector.multi_reduction <add>, %34, %cst_13 [1] : vector<8x100xf32> to vector<8xf32>
    %36 = vector.shape_cast %35 : vector<8xf32> to vector<8x1xf32>
    %37 = vector.extract_strided_slice %2 {offsets = [0, 4], sizes = [8, 1], strides = [1, 1]} : vector<8x6xi32> to vector<8x1xi32>
    %38 = vector.broadcast %37 : vector<8x1xi32> to vector<8x100xi32>
    %39 = arith.cmpi eq, %8, %38 : vector<8x100xi32>
    %cst_14 = arith.constant 0.000000e+00 : f32
    %40 = vector.broadcast %cst_14 : f32 to vector<8x100xf32>
    %41 = arith.select %39, %0, %40 : vector<8x100xi1>, vector<8x100xf32>
    %cst_15 = arith.constant dense<0.000000e+00> : vector<8xf32>
    %42 = vector.multi_reduction <add>, %41, %cst_15 [1] : vector<8x100xf32> to vector<8xf32>
    %43 = vector.shape_cast %42 : vector<8xf32> to vector<8x1xf32>
    %44 = vector.extract_strided_slice %2 {offsets = [0, 5], sizes = [8, 1], strides = [1, 1]} : vector<8x6xi32> to vector<8x1xi32>
    %45 = vector.broadcast %44 : vector<8x1xi32> to vector<8x100xi32>
    %46 = arith.cmpi eq, %8, %45 : vector<8x100xi32>
    %cst_16 = arith.constant 0.000000e+00 : f32
    %47 = vector.broadcast %cst_16 : f32 to vector<8x100xf32>
    %48 = arith.select %46, %0, %47 : vector<8x100xi1>, vector<8x100xf32>
    %cst_17 = arith.constant dense<0.000000e+00> : vector<8xf32>
    %49 = vector.multi_reduction <add>, %48, %cst_17 [1] : vector<8x100xf32> to vector<8xf32>
    %50 = vector.shape_cast %49 : vector<8xf32> to vector<8x1xf32>
    %51 = tpu.concatenate %15, %22, %29, %36, %43, %50 in 1 : vector<8x1xf32>, vector<8x1xf32>, vector<8x1xf32>, vector<8x1xf32>, vector<8x1xf32>, vector<8x1xf32> -> vector<8x6xf32>
    %52 = vector.broadcast %7 : vector<8x1xf32> to vector<8x6xf32>
    %53 = arith.subf %51, %52 : vector<8x6xf32>
    %54 = math.exp %53 : vector<8x6xf32>
    %55 = arith.mulf %5, %54 : vector<8x6xf32>
    %cst_18 = arith.constant dense<0.000000e+00> : vector<8xf32>
    %56 = vector.multi_reduction <add>, %55, %cst_18 [1] : vector<8x6xf32> to vector<8xf32>
    %57 = vector.shape_cast %56 : vector<8xf32> to vector<8x1xf32>
    %58 = vector.broadcast %57 : vector<8x1xf32> to vector<8x6xf32>
    %59 = arith.divf %55, %58 : vector<8x6xf32>
    %60 = tpu.iota {dimensions = array<i32: 1>} : vector<8x6xi32>
    %c0_i32 = arith.constant 0 : i32
    %61 = vector.broadcast %c0_i32 : i32 to vector<8x6xi32>
    %62 = arith.cmpi eq, %60, %61 : vector<8x6xi32>
    %cst_19 = arith.constant 1.000000e+00 : f32
    %63 = vector.broadcast %cst_19 : f32 to vector<8x6xf32>
    %64 = arith.subf %63, %59 : vector<8x6xf32>
    %65 = arith.select %62, %59, %64 : vector<8x6xi1>, vector<8x6xf32>
    %cst_20 = arith.constant 1.000000e-10 : f32
    %66 = vector.broadcast %cst_20 : f32 to vector<8x6xf32>
    %67 = arith.addf %65, %66 : vector<8x6xf32>
    %68 = math.log %67 : vector<8x6xf32>
    %69 = vector.shape_cast %68 : vector<8x6xf32> to vector<1x8x6xf32>
    %cst_21 = arith.constant dense<0.000000e+00> : vector<1xf32>
    %70 = vector.multi_reduction <add>, %69, %cst_21 [1, 2] : vector<1x8x6xf32> to vector<1xf32>
    %71 = vector.shape_cast %70 : vector<1xf32> to vector<1x1x1xf32>
    %72 = vector.extract %71[0, 0, 0] : f32 from vector<1x1x1xf32>
    %cst_22 = arith.constant 0.000000e+00 : f32
    %73 = arith.subf %cst_22, %72 : f32
    %cst_23 = arith.constant 0.020833334 : f32
    %74 = arith.mulf %73, %cst_23 : f32
    %75 = arith.index_cast %arg0 : i32 to index
    %c0_24 = arith.constant 0 : index
    %76 = memref.load %arg3[%75, %c0_24] : memref<1x1xf32, #tpu.memory_space<smem>>
    memref.store %74, %arg3[%75, %c0_24] : memref<1x1xf32, #tpu.memory_space<smem>>
    return
  }
  func.func @transform_0(%arg0: i32) -> (i32, i32) {
    %c0_i32 = arith.constant 0 : i32
    %c0_i32_0 = arith.constant 0 : i32
    return %arg0, %c0_i32 : i32, i32
  }
  func.func @transform_1(%arg0: i32) -> (i32, i32, i32) {
    %c0_i32 = arith.constant 0 : i32
    %c0_i32_0 = arith.constant 0 : i32
    %c0_i32_1 = arith.constant 0 : i32
    return %c0_i32, %arg0, %c0_i32_0 : i32, i32, i32
  }
  func.func @transform_2(%arg0: i32) -> (i32, i32) {
    %c0_i32 = arith.constant 0 : i32
    %c0_i32_0 = arith.constant 0 : i32
    %c0_i32_1 = arith.constant 0 : i32
    return %c0_i32, %c0_i32_0 : i32, i32
  }
}

</mosaic_0001>

<llo_original>
// kernel: tpu_custom_call.1
$region0: #{tpu_custom_call.1}
  #allocation0 [shape = 'u32[]', space=smem, size = 0x4, offset = 0x4, fixed_abs, tag = 'smem constant byte address 0x4 - core index']
  #allocation1 [shape = 'u32[144,128]{1,0:T(1,128)}', space=vmem, size = 0x12000, scoped, tag = 'internal scratch']
  %s0 = inlined_call_operand.vmem [shape: f32[8,100], index: 0, kind: input, shape index: {}]
  %s1 = inlined_call_operand.vmem [shape: s32[2,8,6], index: 1, kind: input, shape index: {}]
  %s2 = inlined_call_operand.hbm [shape: f32[1,1], index: 2, kind: output, shape index: {}]
  %s3 = sld [smem:[#allocation0]]
  $region18: #{tpu_custom_call.1} parent=0
    _
  %s5 = ssub.s32 1, %s3
  %s6 = scalar_select 0, %s5, %s3
  $region1: #{tpu_custom_call.1} parent=0
    #allocation2 [shape = 'u8[512]{0}', space=smem, size = 0x200, scoped, tag = 'output window, operand 0, single buffered']
    #allocation3 [shape = 's32[1]{0}', space=sflag, size = 0x4, scoped, tag = 'scoped memory for tpu_custom_call.1']
    %7 = vsyncpa [#allocation3], 0
    // Predicated region
    $region2: #{tpu_custom_call.1} parent=1 // pred_check
      _
    $region3: #{tpu_custom_call.1} parent=1 // pred_check_branch
      %9 = sbr.rel (0) target = $region5
    $region4: #{tpu_custom_call.1} parent=1 // pred_region
      _
    $region5: #{tpu_custom_call.1} parent=1 // pred_fallthru
      _
    // Predicated region
    $region6: #{tpu_custom_call.1} parent=1 // pred_check
      _
    $region7: #{tpu_custom_call.1} parent=1 // pred_check_branch
      %11 = sbr.rel (0) target = $region9
    $region8: #{tpu_custom_call.1} parent=1 // pred_region
      _
    $region9: #{tpu_custom_call.1} parent=1 // pred_fallthru
      _
    %v12 = vld [vmem:[%s0] sm:$0xff]
    %v13 = vld [vmem:[%s1] sm:$0xff]
    %s14 = scalar_lea.vmem %s1, 8
    %v15 = vld [vmem:[%s14] sm:$0xff]
    %vm17 = vcmask 818176
    %v18 = vsel %vm17, %v12, -inf
    %19 = vmax.xlane.f32.xlu0 %v18
    %v20 = vpop.xlane.xlu0 %19
    %v21 = vlaneseq
    %v22 = vand.u32 %v21, 127
    %23 = vset.pattern.permute.xlu0 0
    %24 = vperm.xlu0 %23, %v13
    %v25 = vpop.permute.xlu0 %24
    %vm26 = vcmp.eq.s32.totalorder %v22, %v25
    %v27 = vsel %vm26, %v12, 0.0
    %v28 = vsel %vm17, %v27, 0.0
    %29 = vadd.xlane.f32.xlu0 %v28
    %v30 = vpop.xlane.xlu0 %29
    %31 = vset.pattern.permute.xlu0 1
    %32 = vperm.xlu0 %31, %v13
    %v33 = vpop.permute.xlu0 %32
    %vm34 = vcmp.eq.s32.totalorder %v22, %v33
    %v35 = vsel %vm34, %v12, 0.0
    %v36 = vsel %vm17, %v35, 0.0
    %37 = vadd.xlane.f32.xlu0 %v36
    %v38 = vpop.xlane.xlu0 %37
    %39 = vset.pattern.permute.xlu0 2
    %40 = vperm.xlu0 %39, %v13
    %v41 = vpop.permute.xlu0 %40
    %vm42 = vcmp.eq.s32.totalorder %v22, %v41
    %v43 = vsel %vm42, %v12, 0.0
    %v44 = vsel %vm17, %v43, 0.0
    %45 = vadd.xlane.f32.xlu0 %v44
    %v46 = vpop.xlane.xlu0 %45
    %47 = vset.pattern.permute.xlu0 3
    %48 = vperm.xlu0 %47, %v13
    %v49 = vpop.permute.xlu0 %48
    %vm50 = vcmp.eq.s32.totalorder %v22, %v49
    %v51 = vsel %vm50, %v12, 0.0
    %v52 = vsel %vm17, %v51, 0.0
    %53 = vadd.xlane.f32.xlu0 %v52
    %v54 = vpop.xlane.xlu0 %53
    %55 = vset.pattern.permute.xlu0 4
    %56 = vperm.xlu0 %55, %v13
    %v57 = vpop.permute.xlu0 %56
    %vm58 = vcmp.eq.s32.totalorder %v22, %v57
    %v59 = vsel %vm58, %v12, 0.0
    %v60 = vsel %vm17, %v59, 0.0
    %61 = vadd.xlane.f32.xlu0 %v60
    %v62 = vpop.xlane.xlu0 %61
    %63 = vset.pattern.permute.xlu0 5
    %64 = vperm.xlu0 %63, %v13
    %v65 = vpop.permute.xlu0 %64
    %vm66 = vcmp.eq.s32.totalorder %v22, %v65
    %v67 = vsel %vm66, %v12, 0.0
    %v68 = vsel %vm17, %v67, 0.0
    %69 = vadd.xlane.f32.xlu0 %v68
    %v70 = vpop.xlane.xlu0 %69
    %vm71 = vcmask 7168
    %v72 = vsel %vm71, %v30, %v38
    %vm73 = vcmask 15360
    %v74 = vsel %vm73, %v72, %v46
    %vm75 = vcmask 23552
    %v76 = vsel %vm75, %v74, %v54
    %vm77 = vcmask 31744
    %v78 = vsel %vm77, %v76, %v62
    %vm79 = vcmask 39936
    %v80 = vsel %vm79, %v78, %v70
    %v81 = vsub.f32 %v80, %v20
    %v82 = vmul.f32 %v81, 1.442695
    %v83 = vpow.pop %v82
    %v84 = vmul.f32 %v15, %v83
    %vm85 = vcmask 48128
    %v86 = vsel %vm85, %v84, 0.0
    %87 = vadd.xlane.f32.xlu0 %v86
    %v88 = vpop.xlane.xlu0 %87
    %v89 = vrcp.pop %v88
    %v90 = vmul.f32 %v84, %v89
    %vm91 = vcmp.eq.s32.totalorder %v22, 0
    %v92 = vsub.f32 1.0, %v90
    %v93 = vsel %vm91, %v90, %v92
    %v94 = vadd.f32 %v93, 1e-10
    %v95 = vlog2.pop %v94
    %v96 = vmul.f32 %v95, 0.6931472
    %v97 = vsel %vm85, %v96, 0.0
    %98 = vadd.xlane.f32.xlu0 %v97
    %v99 = vpop.xlane.xlu0 %98
    %v100 = vrot.slane %v99, 4
    %v101 = vadd.f32 %v99, %v100
    %v102 = vrot.slane %v101, 2
    %v103 = vadd.f32 %v101, %v102
    %v104 = vrot.slane %v103, 1
    %v105 = vadd.f32 %v103, %v104
    %s106 = vtos %v105
    %s107 = ssub.f32 0.0, %s106
    %s108 = smul.f32 %s107, 0.020833334
    %s109 = smul.u32 0, 128
    %s110 = scalar_lea.smem [#allocation2], %s109
    %111 = sst [smem:[%s110]] %s108
    // Predicated region
    $region10: #{tpu_custom_call.1} parent=1 // pred_check
      _
    $region11: #{tpu_custom_call.1} parent=1 // pred_check_branch
      %113 = sbr.rel (0) target = $region13
    $region12: #{tpu_custom_call.1} parent=1 // pred_region
      %s115 = ssub.s32 16, 16
      %116 = vsyncadd [#allocation3], %s115
      %119 = dma.smem_to_hbm [#allocation2], 16, %s2, [#allocation3]
    $region13: #{tpu_custom_call.1} parent=1 // pred_fallthru
      _
    // Predicated region
    $region14: #{tpu_custom_call.1} parent=1 // pred_check
      _
    $region15: #{tpu_custom_call.1} parent=1 // pred_check_branch
      %121 = sbr.rel (0) target = $region17
    $region16: #{tpu_custom_call.1} parent=1 // pred_region
      %122 = dma.done [#allocation3], 16
    $region17: #{tpu_custom_call.1} parent=1 // pred_fallthru
      _
    %123 = sfence
    %124 = vsyncpa [#allocation3], 1

</llo_original>
